<compile_context>
chip_gen: v7x
topology: tpu7x:2x2x1
jax: 0.10.0
libtpu: 0.0.40
codegen_flags: <defaults>
</compile_context>

<pallas_src>
import functools

import jax
import jax.numpy as jnp
from jax.experimental import pallas as pl
from jax.experimental.pallas import tpu as pltpu


def _mha_kernel(*refs, n_heads, d_k, fused, causal, return_weights):
    # Ref order (inputs, outputs, scratch), some optional:
    #   q [, k, v] [, bias], wqkv, bqkv, wo, bo, out [, attn_w], heads_scratch
    idx = 0
    q_ref = refs[idx]; idx += 1
    if fused:
        k_ref = v_ref = None
    else:
        k_ref = refs[idx]; idx += 1
        v_ref = refs[idx]; idx += 1
    bias_ref = None
    if not causal:
        bias_ref = refs[idx]; idx += 1
    wqkv_ref = refs[idx]; idx += 1   # (1, D, 3*d_k), compute dtype (Q part pre-scaled)
    bqkv_ref = refs[idx]; idx += 1   # (1, 1, 3*d_k), f32 (Q part pre-scaled)
    wo_ref = refs[idx]; idx += 1     # (D, D), compute dtype (resident, index (0,0))
    bo_ref = refs[idx]; idx += 1     # (1, D), f32
    out_ref = refs[idx]; idx += 1    # (1, S, D), f32
    attn_w_ref = None
    if return_weights:
        attn_w_ref = refs[idx]; idx += 1   # (1, 1, S, S)
    heads_ref = refs[idx]            # (S, D) scratch, compute dtype

    h = pl.program_id(1)
    cdt = wqkv_ref.dtype             # MXU operand dtype (bf16 or f32)

    xq = q_ref[0]                    # (S, D)
    w_all = wqkv_ref[0]              # (D, 3*d_k)
    b_all = bqkv_ref[0]              # (1, 3*d_k)

    # ---- fused per-head QKV projection (fp32 accumulation) ----
    if fused:
        qkv = jnp.dot(xq, w_all, preferred_element_type=jnp.float32) + b_all     # (S, 3*d_k)
        qh = qkv[:, 0 * d_k:1 * d_k]
        kh = qkv[:, 1 * d_k:2 * d_k]
        vh = qkv[:, 2 * d_k:3 * d_k]
    else:
        xk = k_ref[0]
        xv = v_ref[0]
        qh = jnp.dot(xq, w_all[:, 0 * d_k:1 * d_k],
                     preferred_element_type=jnp.float32) + b_all[:, 0 * d_k:1 * d_k]
        kh = jnp.dot(xk, w_all[:, 1 * d_k:2 * d_k],
                     preferred_element_type=jnp.float32) + b_all[:, 1 * d_k:2 * d_k]
        vh = jnp.dot(xv, w_all[:, 2 * d_k:3 * d_k],
                     preferred_element_type=jnp.float32) + b_all[:, 2 * d_k:3 * d_k]

    # ---- scores = qh @ kh^T (contract last dims, no explicit transpose) ----
    scores = jax.lax.dot_general(
        qh.astype(cdt), kh.astype(cdt),
        dimension_numbers=(((1,), (1,)), ((), ())),
        preferred_element_type=jnp.float32)                                        # (S, S)

    if causal:
        s = scores.shape[0]
        row = jax.lax.broadcasted_iota(jnp.int32, (s, s), 0)
        col = jax.lax.broadcasted_iota(jnp.int32, (s, s), 1)
        scores = jnp.where(col > row, jnp.float32(-1e9), scores)
    else:
        scores = scores + bias_ref[0].astype(jnp.float32)

    # ---- softmax in fp32 ----
    m = jnp.max(scores, axis=-1, keepdims=True)
    e = jnp.exp(scores - m)
    denom = jnp.sum(e, axis=-1, keepdims=True)

    if return_weights:
        # Exact divide so the stored attention weights sum to 1 per row.
        w = e / denom
        attn_w_ref[0, 0] = w.astype(attn_w_ref.dtype)
    else:
        # Fast path: approximate reciprocal on the EUP (frees VALU slots).
        w = e * pl.reciprocal(denom, approx=True)

    head_out = jnp.dot(w.astype(cdt), vh.astype(cdt),
                       preferred_element_type=jnp.float32)                         # (S, d_k)
    head_out = head_out.astype(heads_ref.dtype)

    # ---- write this head's slice of the concatenated output (static slices) ----
    for i in range(n_heads):
        @pl.when(h == i)
        def _store(i=i):
            heads_ref[:, i * d_k:(i + 1) * d_k] = head_out

    # ---- output projection once per batch, full-D contraction depth ----
    @pl.when(h == n_heads - 1)
    def _finalize():
        proj = jnp.dot(heads_ref[...], wo_ref[...],
                       preferred_element_type=jnp.float32)                         # (S, D)
        out_ref[0] = (proj + bo_ref[...]).astype(out_ref.dtype)


def multi_head_attention(Q, K, V, attn_mask, params, n_heads, *,
                         compute_dtype=jnp.bfloat16, return_weights=False,
                         causal=False):
    """Pallas-backed MultiHeadAttention forward.

    Q, K, V: (B, S, D) float32.  attn_mask: (B, S, S) bool (True = masked),
    ignored (may be None) when causal=True.  params: WQ/WK/WV/WO of shape
    (D, D) in PyTorch (out, in) layout and biases bq/bk/bv/bo of shape (D,).
    Returns (output (B, S, D) f32, attn_weights (B, H, S, S) in compute_dtype
    or None).
    """
    B, S, D = Q.shape
    H = n_heads
    assert D % H == 0, "d_model must be divisible by n_heads"
    d_k = D // H
    scale = 1.0 / (float(d_k) ** 0.5)
    cdt = compute_dtype

    # Self-attention (same tensor object) enables the fused single-matmul path.
    fused = (Q is K) and (K is V)

    # ---- pack weights: (H, D, 3*d_k) with 1/sqrt(d_k) folded into the Q part ----
    def per_head(w_t):   # (D_in, D_out) -> (H, D_in, d_k)
        return w_t.reshape(D, H, d_k).transpose(1, 0, 2)

    wqkv = jnp.concatenate([per_head(params["WQ"].T * scale),
                            per_head(params["WK"].T),
                            per_head(params["WV"].T)], axis=-1).astype(cdt)        # (H, D, 3*d_k)
    bqkv = jnp.concatenate([(params["bq"] * scale).reshape(H, 1, d_k),
                            params["bk"].reshape(H, 1, d_k),
                            params["bv"].reshape(H, 1, d_k)],
                           axis=-1).astype(jnp.float32)                            # (H, 1, 3*d_k)
    wo = params["WO"].T.astype(cdt)                                                # (D, D)
    bo = params["bo"].reshape(1, D).astype(jnp.float32)

    operands = [Q.astype(cdt)]
    in_specs = [pl.BlockSpec((1, S, D), lambda b, h: (b, 0, 0))]
    if not fused:
        operands += [K.astype(cdt), V.astype(cdt)]
        in_specs += [pl.BlockSpec((1, S, D), lambda b, h: (b, 0, 0)),
                     pl.BlockSpec((1, S, D), lambda b, h: (b, 0, 0))]
    if not causal:
        # Boolean mask -> additive bf16 bias, built once outside the kernel.
        bias = jnp.where(attn_mask, jnp.float32(-1e9),
                         jnp.float32(0.0)).astype(jnp.bfloat16)
        operands.append(bias)
        in_specs.append(pl.BlockSpec((1, S, S), lambda b, h: (b, 0, 0)))
    operands += [wqkv, bqkv, wo, bo]
    in_specs += [
        pl.BlockSpec((1, D, 3 * d_k), lambda b, h: (h, 0, 0)),
        pl.BlockSpec((1, 1, 3 * d_k), lambda b, h: (h, 0, 0)),
        pl.BlockSpec((D, D), lambda b, h: (0, 0)),
        pl.BlockSpec((1, D), lambda b, h: (0, 0)),
    ]

    out_shape = [jax.ShapeDtypeStruct((B, S, D), jnp.float32)]
    out_specs = [pl.BlockSpec((1, S, D), lambda b, h: (b, 0, 0))]
    if return_weights:
        out_shape.append(jax.ShapeDtypeStruct((B, H, S, S), cdt))
        out_specs.append(pl.BlockSpec((1, 1, S, S), lambda b, h: (b, h, 0, 0)))

    # Explicit scoped-VMEM budget from the actual block sizes (with headroom).
    cb = jnp.dtype(cdt).itemsize
    blk_in = (S * D * cb * (1 if fused else 3)
              + (0 if causal else S * S * 2)
              + D * 3 * d_k * cb + 3 * d_k * 4 + D * D * cb + D * 4)
    blk_out = S * D * 4 + (S * S * cb if return_weights else 0)
    needed = 2 * (blk_in + blk_out) + S * D * cb
    vmem_limit = int(min(64 * 1024 * 1024, max(32 * 1024 * 1024, 2 * needed)))

    kernel = functools.partial(_mha_kernel, n_heads=H, d_k=d_k,
                               fused=fused, causal=causal,
                               return_weights=return_weights)

    results = pl.pallas_call(
        kernel,
        out_shape=tuple(out_shape),
        grid_spec=pltpu.PrefetchScalarGridSpec(
            num_scalar_prefetch=0,
            grid=(B, H),
            in_specs=in_specs,
            out_specs=out_specs,
            scratch_shapes=[pltpu.VMEM((S, D), cdt)],
        ),
        compiler_params=pltpu.CompilerParams(
            dimension_semantics=("parallel", "arbitrary"),
            vmem_limit_bytes=vmem_limit),
    )(*operands)

    if return_weights:
        out, attn_w = results
        return out, attn_w
    (out,) = results
    return out, None


def _reference(Q, K, V, attn_mask, params, n_heads):
    """Pure-JAX fp32 reference mirroring the PyTorch module."""
    B, S, D = Q.shape
    d_k = D // n_heads

    def lin(x, w, b):
        return x @ w.T + b

    q = lin(Q, params["WQ"], params["bq"]).reshape(B, S, n_heads, d_k).transpose(0, 2, 1, 3)
    k = lin(K, params["WK"], params["bk"]).reshape(B, S, n_heads, d_k).transpose(0, 2, 1, 3)
    v = lin(V, params["WV"], params["bv"]).reshape(B, S, n_heads, d_k).transpose(0, 2, 1, 3)

    scores = jnp.einsum("bhqd,bhkd->bhqk", q, k) / (d_k ** 0.5)
    scores = jnp.where(attn_mask[:, None, :, :], -1e9, scores)
    w = jax.nn.softmax(scores, axis=-1)
    attn = jnp.einsum("bhqk,bhkd->bhqd", w, v)
    attn = attn.transpose(0, 2, 1, 3).reshape(B, S, D)
    out = attn @ params["WO"].T + params["bo"]
    return out, w


if __name__ == "__main__":
    B, S, D, H = 2, 8, 32, 4

    key = jax.random.PRNGKey(0)
    keys = jax.random.split(key, 12)

    params = {
        "WQ": 0.02 * jax.random.normal(keys[0], (D, D), jnp.float32),
        "bq": 0.02 * jax.random.normal(keys[1], (D,), jnp.float32),
        "WK": 0.02 * jax.random.normal(keys[2], (D, D), jnp.float32),
        "bk": 0.02 * jax.random.normal(keys[3], (D,), jnp.float32),
        "WV": 0.02 * jax.random.normal(keys[4], (D, D), jnp.float32),
        "bv": 0.02 * jax.random.normal(keys[5], (D,), jnp.float32),
        "WO": 0.02 * jax.random.normal(keys[6], (D, D), jnp.float32),
        "bo": 0.02 * jax.random.normal(keys[7], (D,), jnp.float32),
    }

    X = jax.random.normal(keys[8], (B, S, D), jnp.float32)
    Kx = jax.random.normal(keys[9], (B, S, D), jnp.float32)
    Vx = jax.random.normal(keys[10], (B, S, D), jnp.float32)

    causal_mask = jnp.broadcast_to(
        jnp.triu(jnp.ones((S, S), dtype=jnp.bool_), k=1), (B, S, S))

    # 1) Self-attention (fused QKV path), boolean mask shipped as bf16 additive
    #    bias, fp32 MXU operands, weights returned (accuracy check).
    out, attn_w = multi_head_attention(X, X, X, causal_mask, params, H,
                                       compute_dtype=jnp.float32,
                                       return_weights=True)
    out = jax.block_until_ready(out)
    attn_w = jax.block_until_ready(attn_w)
    ref_out, ref_w = _reference(X, X, X, causal_mask, params, H)
    assert out.shape == (B, S, D) and attn_w.shape == (B, H, S, S)
    assert jnp.allclose(out, ref_out, atol=2e-3, rtol=2e-3)
    assert jnp.allclose(attn_w.astype(jnp.float32), ref_w, atol=2e-3, rtol=2e-3)

    # 2) Fast path: bf16 MXU operands (default), in-kernel causal mask, no
    #    attention-weights writeback.
    out_fast, none_w = multi_head_attention(X, X, X, None, params, H, causal=True)
    out_fast = jax.block_until_ready(out_fast)
    assert none_w is None
    assert jnp.allclose(out_fast, ref_out, atol=3e-2, rtol=3e-2)

    # 3) Distinct Q/K/V (unfused projection path) with a key-padding mask, bf16,
    #    bf16 attention weights.
    lengths = jnp.array([6, 5])
    pad_mask = jnp.broadcast_to(
        jnp.arange(S)[None, None, :] >= lengths[:, None, None], (B, S, S))
    out3, w3 = multi_head_attention(X, Kx, Vx, pad_mask, params, H,
                                    return_weights=True)
    out3 = jax.block_until_ready(out3)
    w3 = jax.block_until_ready(w3)
    ref_out3, ref_w3 = _reference(X, Kx, Vx, pad_mask, params, H)
    assert jnp.allclose(out3, ref_out3, atol=3e-2, rtol=3e-2)
    assert jnp.allclose(w3.astype(jnp.float32), ref_w3, atol=3e-2, rtol=3e-2)

    print("KERNEL_OK")
</pallas_src>

<mosaic_0001>
module attributes {stable_mosaic.version = 11 : i64} {
  func.func @_mha_kernel(%arg0: i32, %arg1: i32, %arg2: memref<1x8x32xf32, #tpu.memory_space<vmem>>, %arg3: memref<1x8x8xbf16, #tpu.memory_space<vmem>>, %arg4: memref<1x32x24xf32, #tpu.memory_space<vmem>>, %arg5: memref<1x1x24xf32, #tpu.memory_space<vmem>>, %arg6: memref<32x32xf32, #tpu.memory_space<vmem>>, %arg7: memref<1x32xf32, #tpu.memory_space<vmem>>, %arg8: memref<1x8x32xf32, #tpu.memory_space<vmem>>, %arg9: memref<1x1x8x8xf32, #tpu.memory_space<vmem>>, %arg10: memref<8x32xf32, #tpu.memory_space<vmem>>) attributes {dimension_semantics = [#tpu.dimension_semantics<parallel>, #tpu.dimension_semantics<arbitrary>], iteration_bounds = array<i64: 2, 4>, scalar_prefetch = 0 : i64, scratch_operands = 1 : i64, tpu.core_type = #tpu.core_type<tc>, window_params = [{transform_indices = @transform_0, window_bounds = array<i64: 1, 8, 32>}, {transform_indices = @transform_1, window_bounds = array<i64: 1, 8, 8>}, {transform_indices = @transform_2, window_bounds = array<i64: 1, 32, 24>}, {transform_indices = @transform_3, window_bounds = array<i64: 1, 1, 24>}, {pipeline_mode = #tpu.pipeline_mode<synchronous>, transform_indices = @transform_4, window_bounds = array<i64: 32, 32>}, {pipeline_mode = #tpu.pipeline_mode<synchronous>, transform_indices = @transform_5, window_bounds = array<i64: 1, 32>}, {transform_indices = @transform_6, window_bounds = array<i64: 1, 8, 32>}, {transform_indices = @transform_7, window_bounds = array<i64: 1, 1, 8, 8>}]} {
    %c0 = arith.constant 0 : index
    %c0_0 = arith.constant 0 : index
    %c0_1 = arith.constant 0 : index
    %0 = vector.load %arg2[%c0, %c0_0, %c0_1] : memref<1x8x32xf32, #tpu.memory_space<vmem>>, vector<1x8x32xf32>
    %1 = vector.shape_cast %0 : vector<1x8x32xf32> to vector<8x32xf32>
    %c0_2 = arith.constant 0 : index
    %c0_3 = arith.constant 0 : index
    %c0_4 = arith.constant 0 : index
    %2 = vector.load %arg4[%c0_2, %c0_3, %c0_4] : memref<1x32x24xf32, #tpu.memory_space<vmem>>, vector<1x32x24xf32>
    %3 = vector.shape_cast %2 : vector<1x32x24xf32> to vector<32x24xf32>
    %c0_5 = arith.constant 0 : index
    %c0_6 = arith.constant 0 : index
    %c0_7 = arith.constant 0 : index
    %4 = vector.load %arg5[%c0_5, %c0_6, %c0_7] : memref<1x1x24xf32, #tpu.memory_space<vmem>>, vector<1x1x24xf32>
    %5 = vector.shape_cast %4 : vector<1x1x24xf32> to vector<1x24xf32>
    %cst = arith.constant dense<0.000000e+00> : vector<8x24xf32>
    %6 = tpu.matmul %1, %3, %cst {dimension_numbers = #tpu.dot_dimension_numbers<[1], [0], [0], [1], [0, 0, 1, 1], [], []>} : vector<8x32xf32>, vector<32x24xf32>, vector<8x24xf32> -> vector<8x24xf32>
    %7 = vector.broadcast %5 : vector<1x24xf32> to vector<8x24xf32>
    %8 = arith.addf %6, %7 : vector<8x24xf32>
    %9 = vector.extract_strided_slice %8 {offsets = [0, 0], sizes = [8, 8], strides = [1, 1]} : vector<8x24xf32> to vector<8x8xf32>
    %10 = vector.extract_strided_slice %8 {offsets = [0, 8], sizes = [8, 8], strides = [1, 1]} : vector<8x24xf32> to vector<8x8xf32>
    %11 = vector.extract_strided_slice %8 {offsets = [0, 16], sizes = [8, 8], strides = [1, 1]} : vector<8x24xf32> to vector<8x8xf32>
    %cst_8 = arith.constant dense<0.000000e+00> : vector<8x8xf32>
    %12 = tpu.matmul %9, %10, %cst_8 {dimension_numbers = #tpu.dot_dimension_numbers<[1], [1], [0], [0], [0, 0, 1, 0], [], []>} : vector<8x8xf32>, vector<8x8xf32>, vector<8x8xf32> -> vector<8x8xf32>
    %c0_9 = arith.constant 0 : index
    %c0_10 = arith.constant 0 : index
    %c0_11 = arith.constant 0 : index
    %13 = vector.load %arg3[%c0_9, %c0_10, %c0_11] : memref<1x8x8xbf16, #tpu.memory_space<vmem>>, vector<1x8x8xbf16>
    %14 = vector.shape_cast %13 : vector<1x8x8xbf16> to vector<8x8xbf16>
    %15 = arith.extf %14 : vector<8x8xbf16> to vector<8x8xf32>
    %16 = arith.addf %12, %15 : vector<8x8xf32>
    %cst_12 = arith.constant dense<0xFF800000> : vector<8xf32>
    %17 = vector.multi_reduction <maximumf>, %16, %cst_12 [1] : vector<8x8xf32> to vector<8xf32>
    %18 = vector.shape_cast %17 : vector<8xf32> to vector<8x1xf32>
    %19 = vector.broadcast %18 : vector<8x1xf32> to vector<8x8xf32>
    %20 = arith.subf %16, %19 : vector<8x8xf32>
    %21 = math.exp %20 : vector<8x8xf32>
    %cst_13 = arith.constant dense<0.000000e+00> : vector<8xf32>
    %22 = vector.multi_reduction <add>, %21, %cst_13 [1] : vector<8x8xf32> to vector<8xf32>
    %23 = vector.shape_cast %22 : vector<8xf32> to vector<8x1xf32>
    %24 = vector.broadcast %23 : vector<8x1xf32> to vector<8x8xf32>
    %25 = arith.divf %21, %24 : vector<8x8xf32>
    %c0_14 = arith.constant 0 : index
    %c0_15 = arith.constant 0 : index
    %c0_16 = arith.constant 0 : index
    %c0_17 = arith.constant 0 : index
    %26 = vector.load %arg9[%c0_14, %c0_15, %c0_16, %c0_17] : memref<1x1x8x8xf32, #tpu.memory_space<vmem>>, vector<1x1x8x8xf32>
    %27 = vector.shape_cast %26 : vector<1x1x8x8xf32> to vector<8x8xf32>
    %28 = vector.shape_cast %25 : vector<8x8xf32> to vector<1x1x8x8xf32>
    tpu.vector_store %arg9[%c0_14, %c0_15, %c0_16, %c0_17], %28 {strides = array<i32>} : memref<1x1x8x8xf32, #tpu.memory_space<vmem>>, vector<1x1x8x8xf32>,
    %cst_18 = arith.constant dense<0.000000e+00> : vector<8x8xf32>
    %29 = tpu.matmul %25, %11, %cst_18 {dimension_numbers = #tpu.dot_dimension_numbers<[1], [0], [0], [1], [0, 0, 1, 1], [], []>} : vector<8x8xf32>, vector<8x8xf32>, vector<8x8xf32> -> vector<8x8xf32>
    %c0_i32 = arith.constant 0 : i32
    %30 = arith.cmpi eq, %arg1, %c0_i32 : i32
    %31 = arith.extui %30 : i1 to i32
    %c0_i32_19 = arith.constant 0 : i32
    %32 = arith.cmpi ne, %31, %c0_i32_19 : i32
    scf.if %32 {
      %c0_25 = arith.constant 0 : index
      %c0_26 = arith.constant 0 : index
      %45 = vector.load %arg10[%c0_25, %c0_26] : memref<8x32xf32, #tpu.memory_space<vmem>>, vector<8x8xf32>
      tpu.vector_store %arg10[%c0_25, %c0_26], %29 {strides = array<i32>} : memref<8x32xf32, #tpu.memory_space<vmem>>, vector<8x8xf32>,
    } else {
    }
    %c1_i32 = arith.constant 1 : i32
    %33 = arith.cmpi eq, %arg1, %c1_i32 : i32
    %34 = arith.extui %33 : i1 to i32
    %c0_i32_20 = arith.constant 0 : i32
    %35 = arith.cmpi ne, %34, %c0_i32_20 : i32
    scf.if %35 {
      %c0_25 = arith.constant 0 : index
      %c8 = arith.constant 8 : index
      %45 = vector.load %arg10[%c0_25, %c8] : memref<8x32xf32, #tpu.memory_space<vmem>>, vector<8x8xf32>
      tpu.vector_store %arg10[%c0_25, %c8], %29 {strides = array<i32>} : memref<8x32xf32, #tpu.memory_space<vmem>>, vector<8x8xf32>,
    } else {
    }
    %c2_i32 = arith.constant 2 : i32
    %36 = arith.cmpi eq, %arg1, %c2_i32 : i32
    %37 = arith.extui %36 : i1 to i32
    %c0_i32_21 = arith.constant 0 : i32
    %38 = arith.cmpi ne, %37, %c0_i32_21 : i32
    scf.if %38 {
      %c0_25 = arith.constant 0 : index
      %c16 = arith.constant 16 : index
      %45 = vector.load %arg10[%c0_25, %c16] : memref<8x32xf32, #tpu.memory_space<vmem>>, vector<8x8xf32>
      tpu.vector_store %arg10[%c0_25, %c16], %29 {strides = array<i32>} : memref<8x32xf32, #tpu.memory_space<vmem>>, vector<8x8xf32>,
    } else {
    }
    %c3_i32 = arith.constant 3 : i32
    %39 = arith.cmpi eq, %arg1, %c3_i32 : i32
    %40 = arith.extui %39 : i1 to i32
    %c0_i32_22 = arith.constant 0 : i32
    %41 = arith.cmpi ne, %40, %c0_i32_22 : i32
    scf.if %41 {
      %c0_25 = arith.constant 0 : index
      %c24 = arith.constant 24 : index
      %45 = vector.load %arg10[%c0_25, %c24] : memref<8x32xf32, #tpu.memory_space<vmem>>, vector<8x8xf32>
      tpu.vector_store %arg10[%c0_25, %c24], %29 {strides = array<i32>} : memref<8x32xf32, #tpu.memory_space<vmem>>, vector<8x8xf32>,
    } else {
    }
    %c3_i32_23 = arith.constant 3 : i32
    %42 = arith.cmpi eq, %arg1, %c3_i32_23 : i32
    %43 = arith.extui %42 : i1 to i32
    %c0_i32_24 = arith.constant 0 : i32
    %44 = arith.cmpi ne, %43, %c0_i32_24 : i32
    scf.if %44 {
      %c0_25 = arith.constant 0 : index
      %c0_26 = arith.constant 0 : index
      %45 = vector.load %arg10[%c0_25, %c0_26] : memref<8x32xf32, #tpu.memory_space<vmem>>, vector<8x32xf32>
      %c0_27 = arith.constant 0 : index
      %c0_28 = arith.constant 0 : index
      %46 = vector.load %arg6[%c0_27, %c0_28] : memref<32x32xf32, #tpu.memory_space<vmem>>, vector<32x32xf32>
      %cst_29 = arith.constant dense<0.000000e+00> : vector<8x32xf32>
      %47 = tpu.matmul %45, %46, %cst_29 {dimension_numbers = #tpu.dot_dimension_numbers<[1], [0], [0], [1], [0, 0, 1, 1], [], []>} : vector<8x32xf32>, vector<32x32xf32>, vector<8x32xf32> -> vector<8x32xf32>
      %c0_30 = arith.constant 0 : index
      %c0_31 = arith.constant 0 : index
      %48 = vector.load %arg7[%c0_30, %c0_31] : memref<1x32xf32, #tpu.memory_space<vmem>>, vector<1x32xf32>
      %49 = vector.broadcast %48 : vector<1x32xf32> to vector<8x32xf32>
      %50 = arith.addf %47, %49 : vector<8x32xf32>
      %c0_32 = arith.constant 0 : index
      %c0_33 = arith.constant 0 : index
      %c0_34 = arith.constant 0 : index
      %51 = vector.load %arg8[%c0_32, %c0_33, %c0_34] : memref<1x8x32xf32, #tpu.memory_space<vmem>>, vector<1x8x32xf32>
      %52 = vector.shape_cast %51 : vector<1x8x32xf32> to vector<8x32xf32>
      %53 = vector.shape_cast %50 : vector<8x32xf32> to vector<1x8x32xf32>
      tpu.vector_store %arg8[%c0_32, %c0_33, %c0_34], %53 {strides = array<i32>} : memref<1x8x32xf32, #tpu.memory_space<vmem>>, vector<1x8x32xf32>,
    } else {
    }
    return
  }
  func.func @transform_0(%arg0: i32, %arg1: i32) -> (i32, i32, i32) {
    %c0_i32 = arith.constant 0 : i32
    %c0_i32_0 = arith.constant 0 : i32
    %c0_i32_1 = arith.constant 0 : i32
    return %arg0, %c0_i32, %c0_i32_0 : i32, i32, i32
  }
  func.func @transform_1(%arg0: i32, %arg1: i32) -> (i32, i32, i32) {
    %c0_i32 = arith.constant 0 : i32
    %c0_i32_0 = arith.constant 0 : i32
    %c0_i32_1 = arith.constant 0 : i32
    return %arg0, %c0_i32, %c0_i32_0 : i32, i32, i32
  }
  func.func @transform_2(%arg0: i32, %arg1: i32) -> (i32, i32, i32) {
    %c0_i32 = arith.constant 0 : i32
    %c0_i32_0 = arith.constant 0 : i32
    %c0_i32_1 = arith.constant 0 : i32
    return %arg1, %c0_i32, %c0_i32_0 : i32, i32, i32
  }
  func.func @transform_3(%arg0: i32, %arg1: i32) -> (i32, i32, i32) {
    %c0_i32 = arith.constant 0 : i32
    %c0_i32_0 = arith.constant 0 : i32
    %c0_i32_1 = arith.constant 0 : i32
    return %arg1, %c0_i32, %c0_i32_0 : i32, i32, i32
  }
  func.func @transform_4(%arg0: i32, %arg1: i32) -> (i32, i32) {
    %c0_i32 = arith.constant 0 : i32
    %c0_i32_0 = arith.constant 0 : i32
    %c0_i32_1 = arith.constant 0 : i32
    return %c0_i32, %c0_i32_0 : i32, i32
  }
  func.func @transform_5(%arg0: i32, %arg1: i32) -> (i32, i32) {
    %c0_i32 = arith.constant 0 : i32
    %c0_i32_0 = arith.constant 0 : i32
    %c0_i32_1 = arith.constant 0 : i32
    return %c0_i32, %c0_i32_0 : i32, i32
  }
  func.func @transform_6(%arg0: i32, %arg1: i32) -> (i32, i32, i32) {
    %c0_i32 = arith.constant 0 : i32
    %c0_i32_0 = arith.constant 0 : i32
    %c0_i32_1 = arith.constant 0 : i32
    return %arg0, %c0_i32, %c0_i32_0 : i32, i32, i32
  }
  func.func @transform_7(%arg0: i32, %arg1: i32) -> (i32, i32, i32, i32) {
    %c0_i32 = arith.constant 0 : i32
    %c0_i32_0 = arith.constant 0 : i32
    %c0_i32_1 = arith.constant 0 : i32
    return %arg0, %arg1, %c0_i32, %c0_i32_0 : i32, i32, i32, i32
  }
}

</mosaic_0001>

<llo_original>
// kernel: tpu_custom_call.1
$region0: #{tpu_custom_call.1}
  #allocation0 [shape = 'u32[]', space=smem, size = 0x4, offset = 0x4, fixed_abs, tag = 'smem constant byte address 0x4 - core index']
  #allocation1 [shape = 'u32[144,128]{1,0:T(1,128)}', space=vmem, size = 0x12000, scoped, tag = 'internal scratch']
  #allocation2 [shape = 'f32[8,32]{1,0:T(8,128)}', space=vmem, size = 0x1000, scoped, tag = 'scratch operand']
  %s0 = inlined_call_operand.vmem [shape: f32[2,8,32], index: 0, kind: input, shape index: {}]
  %s1 = inlined_call_operand.vmem [shape: bf16[2,8,8], index: 1, kind: input, shape index: {}]
  %s2 = inlined_call_operand.vmem [shape: f32[4,32,24], index: 2, kind: input, shape index: {}]
  %s3 = inlined_call_operand.vmem [shape: f32[4,1,24], index: 3, kind: input, shape index: {}]
  %s4 = inlined_call_operand.vmem [shape: f32[32,32], index: 4, kind: input, shape index: {}]
  %s5 = inlined_call_operand.vmem [shape: f32[1,32], index: 5, kind: input, shape index: {}]
  %s6 = inlined_call_operand.hbm [shape: f32[2,8,32], index: 6, kind: output, shape index: {0}]
  %s7 = inlined_call_operand.hbm [shape: f32[2,4,8,8], index: 7, kind: output, shape index: {1}]
  %8 = xla_tuple %s6, %s7
  %s9 = sld [smem:[#allocation0]]
  $region81: #{tpu_custom_call.1} parent=0
    _
  %s11 = ssub.s32 1, %s9
  %s12 = scalar_select 0, %s11, %s9
  $region1: #{tpu_custom_call.1} parent=0
    #allocation3 [shape = 'u8[8192]{0}', space=vmem, size = 0x2000, scoped, tag = 'output window, operand 0']
    #allocation4 [shape = 's32[2]{0}', space=sflag, size = 0x8, scoped, tag = 'scoped memory for tpu_custom_call.1']
    #allocation5 [shape = 'u8[8192]{0}', space=vmem, size = 0x2000, scoped, tag = 'output window, operand 1']
    #allocation6 [shape = 's32[2]{0}', space=sflag, size = 0x8, scoped, tag = 'scoped memory for tpu_custom_call.1']
    %13 = vsyncpa [#allocation4], 0
    %s14 = scalar_lea.sflag [#allocation4], 1
    %15 = vsyncpa %s14, 0
    %16 = vsyncpa [#allocation6], 0
    %s17 = scalar_lea.sflag [#allocation6], 1
    %18 = vsyncpa %s17, 0
    loop: start=0, step=1, limit=10
    $region2: #{tpu_custom_call.1} parent=1 // loop_pre_header
      _
    $region3: #{tpu_custom_call.1} parent=1 // loop_header
      %s20 = sphi 0, %s24
      %p21 = scmp.ge.s32.totalorder %s20, 10
      %s27 = sphi 0, %s39
      %s28 = sphi 0, %s35
      %s29 = sphi 0, %s27
      %s30 = sphi 0, %s28
      %s31 = sphi 0, %s29
      %s32 = sphi 0, %s30
      %s42 = sphi 0, %s44
      %s45 = sphi 0, %s42
      %s46 = sphi 0, %s45
      %s62 = sphi 0, %s46
      %s68 = sphi 0, %s70
      %s71 = sphi 0, %s68
      %s72 = sphi 0, %s71
      %s88 = sphi 0, %s72
      %s94 = sphi 0, %s96
      %s97 = sphi 0, %s94
      %s98 = sphi 0, %s97
      %s114 = sphi 0, %s98
      %s120 = sphi 0, %s122
      %s123 = sphi 0, %s120
      %s124 = sphi 0, %s123
      %s140 = sphi 0, %s124
      %s144 = sphi 0, %s144
      %s146 = sphi 0, %s144
      %s147 = sphi 0, %s146
      %s161 = sphi 0, %s147
      %s165 = sphi 0, %s165
      %s167 = sphi 0, %s165
      %s168 = sphi 0, %s167
      %s182 = sphi 0, %s168
      %s188 = sphi 0, %s190
      %s191 = sphi 0, %s188
      %s192 = sphi 0, %s191
      %s208 = sphi 0, %s192
      %s216 = sphi 0, %s218
      %s219 = sphi 0, %s216
      %s220 = sphi 0, %s219
      %s236 = sphi 0, %s220
    $region4: #{tpu_custom_call.1} parent=1 // loop_header_branch
      %23 = sbr.rel (%p21) target = $region8
    $region5: #{tpu_custom_call.1} parent=1 // loop_body
      %s25 = ssub.s32 %s20, 1
      %s26 = ssub.s32 %s20, 2
      %s33 = sadd.s32 1, %s28
      %p34 = scmp.ge.s32.totalorder %s33, 4
      %s35 = scalar_select %p34, 0, %s33
      %s36 = sadd.s32 1, %s27
      %s37 = scalar_select %p34, %s36, %s27
      %p38 = scmp.ge.s32.totalorder %s37, 2
      %s39 = scalar_select %p38, 0, %s37
      %s40 = ssub.s32 %s27, %s39
      %p41 = scmp.eq.s32.totalorder %s40, 0
      %s43 = sadd.s32 %s42, 1
      %s44 = scalar_select %p41, %s42, %s43
      %p47 = pneg %p41
      %p48 = scmp.eq.s32.totalorder %s20, 7
      %p49 = por %p47, %p48
      %p50 = scmp.ne.s32.totalorder %s42, %s45
      %p51 = scmp.eq.s32.totalorder %s20, 0
      %p52 = por %p50, %p51
      %p53 = scmp.ne.s32.totalorder %s42, %s45
      %p54 = scmp.eq.s32.totalorder %s25, 7
      %p55 = por %p53, %p54
      %p56 = scmp.ne.s32.totalorder %s45, %s46
      %p57 = scmp.eq.s32.totalorder %s25, 0
      %p58 = por %p56, %p57
      %p59 = scmp.ne.s32.totalorder %s45, %s46
      %p60 = scmp.eq.s32.totalorder %s26, 7
      %p61 = por %p59, %p60
      %p63 = scmp.ne.s32.totalorder %s46, %s62
      %p64 = scmp.eq.s32.totalorder %s26, 0
      %p65 = por %p63, %p64
      %s66 = ssub.s32 %s27, %s39
      %p67 = scmp.eq.s32.totalorder %s66, 0
      %s69 = sadd.s32 %s68, 1
      %s70 = scalar_select %p67, %s68, %s69
      %p73 = pneg %p67
      %p74 = scmp.eq.s32.totalorder %s20, 7
      %p75 = por %p73, %p74
      %p76 = scmp.ne.s32.totalorder %s68, %s71
      %p77 = scmp.eq.s32.totalorder %s20, 0
      %p78 = por %p76, %p77
      %p79 = scmp.ne.s32.totalorder %s68, %s71
      %p80 = scmp.eq.s32.totalorder %s25, 7
      %p81 = por %p79, %p80
      %p82 = scmp.ne.s32.totalorder %s71, %s72
      %p83 = scmp.eq.s32.totalorder %s25, 0
      %p84 = por %p82, %p83
      %p85 = scmp.ne.s32.totalorder %s71, %s72
      %p86 = scmp.eq.s32.totalorder %s26, 7
      %p87 = por %p85, %p86
      %p89 = scmp.ne.s32.totalorder %s72, %s88
      %p90 = scmp.eq.s32.totalorder %s26, 0
      %p91 = por %p89, %p90
      %s92 = ssub.s32 %s28, %s35
      %p93 = scmp.eq.s32.totalorder %s92, 0
      %s95 = sadd.s32 %s94, 1
      %s96 = scalar_select %p93, %s94, %s95
      %p99 = pneg %p93
      %p100 = scmp.eq.s32.totalorder %s20, 7
      %p101 = por %p99, %p100
      %p102 = scmp.ne.s32.totalorder %s94, %s97
      %p103 = scmp.eq.s32.totalorder %s20, 0
      %p104 = por %p102, %p103
      %p105 = scmp.ne.s32.totalorder %s94, %s97
      %p106 = scmp.eq.s32.totalorder %s25, 7
      %p107 = por %p105, %p106
      %p108 = scmp.ne.s32.totalorder %s97, %s98
      %p109 = scmp.eq.s32.totalorder %s25, 0
      %p110 = por %p108, %p109
      %p111 = scmp.ne.s32.totalorder %s97, %s98
      %p112 = scmp.eq.s32.totalorder %s26, 7
      %p113 = por %p111, %p112
      %p115 = scmp.ne.s32.totalorder %s98, %s114
      %p116 = scmp.eq.s32.totalorder %s26, 0
      %p117 = por %p115, %p116
      %s118 = ssub.s32 %s28, %s35
      %p119 = scmp.eq.s32.totalorder %s118, 0
      %s121 = sadd.s32 %s120, 1
      %s122 = scalar_select %p119, %s120, %s121
      %p125 = pneg %p119
      %p126 = scmp.eq.s32.totalorder %s20, 7
      %p127 = por %p125, %p126
      %p128 = scmp.ne.s32.totalorder %s120, %s123
      %p129 = scmp.eq.s32.totalorder %s20, 0
      %p130 = por %p128, %p129
      %p131 = scmp.ne.s32.totalorder %s120, %s123
      %p132 = scmp.eq.s32.totalorder %s25, 7
      %p133 = por %p131, %p132
      %p134 = scmp.ne.s32.totalorder %s123, %s124
      %p135 = scmp.eq.s32.totalorder %s25, 0
      %p136 = por %p134, %p135
      %p137 = scmp.ne.s32.totalorder %s123, %s124
      %p138 = scmp.eq.s32.totalorder %s26, 7
      %p139 = por %p137, %p138
      %p141 = scmp.ne.s32.totalorder %s124, %s140
      %p142 = scmp.eq.s32.totalorder %s26, 0
      %p143 = por %p141, %p142
      %s145 = sadd.s32 %s144, 1
      %p148 = scmp.eq.s32.totalorder %s20, 7
      %p149 = scmp.ne.s32.totalorder %s144, %s146
      %p150 = scmp.eq.s32.totalorder %s20, 0
      %p151 = por %p149, %p150
      %p152 = scmp.ne.s32.totalorder %s144, %s146
      %p153 = scmp.eq.s32.totalorder %s25, 7
      %p154 = por %p152, %p153
      %p155 = scmp.ne.s32.totalorder %s146, %s147
      %p156 = scmp.eq.s32.totalorder %s25, 0
      %p157 = por %p155, %p156
      %p158 = scmp.ne.s32.totalorder %s146, %s147
      %p159 = scmp.eq.s32.totalorder %s26, 7
      %p160 = por %p158, %p159
      %p162 = scmp.ne.s32.totalorder %s147, %s161
      %p163 = scmp.eq.s32.totalorder %s26, 0
      %p164 = por %p162, %p163
      %s166 = sadd.s32 %s165, 1
      %p169 = scmp.eq.s32.totalorder %s20, 7
      %p170 = scmp.ne.s32.totalorder %s165, %s167
      %p171 = scmp.eq.s32.totalorder %s20, 0
      %p172 = por %p170, %p171
      %p173 = scmp.ne.s32.totalorder %s165, %s167
      %p174 = scmp.eq.s32.totalorder %s25, 7
      %p175 = por %p173, %p174
      %p176 = scmp.ne.s32.totalorder %s167, %s168
      %p177 = scmp.eq.s32.totalorder %s25, 0
      %p178 = por %p176, %p177
      %p179 = scmp.ne.s32.totalorder %s167, %s168
      %p180 = scmp.eq.s32.totalorder %s26, 7
      %p181 = por %p179, %p180
      %p183 = scmp.ne.s32.totalorder %s168, %s182
      %p184 = scmp.eq.s32.totalorder %s26, 0
      %p185 = por %p183, %p184
      %s186 = ssub.s32 %s27, %s39
      %p187 = scmp.eq.s32.totalorder %s186, 0
      %s189 = sadd.s32 %s188, 1
      %s190 = scalar_select %p187, %s188, %s189
      %p193 = pneg %p187
      %p194 = scmp.eq.s32.totalorder %s20, 7
      %p195 = por %p193, %p194
      %p196 = scmp.ne.s32.totalorder %s188, %s191
      %p197 = scmp.eq.s32.totalorder %s20, 0
      %p198 = por %p196, %p197
      %p199 = scmp.ne.s32.totalorder %s188, %s191
      %p200 = scmp.eq.s32.totalorder %s25, 7
      %p201 = por %p199, %p200
      %p202 = scmp.ne.s32.totalorder %s191, %s192
      %p203 = scmp.eq.s32.totalorder %s25, 0
      %p204 = por %p202, %p203
      %p205 = scmp.ne.s32.totalorder %s191, %s192
      %p206 = scmp.eq.s32.totalorder %s26, 7
      %p207 = por %p205, %p206
      %p209 = scmp.ne.s32.totalorder %s192, %s208
      %p210 = scmp.eq.s32.totalorder %s26, 0
      %p211 = por %p209, %p210
      %s212 = ssub.s32 %s27, %s39
      %s213 = ssub.s32 %s28, %s35
      %s214 = sor.u32 %s212, %s213
      %p215 = scmp.eq.s32.totalorder %s214, 0
      %s217 = sadd.s32 %s216, 1
      %s218 = scalar_select %p215, %s216, %s217
      %p221 = pneg %p215
      %p222 = scmp.eq.s32.totalorder %s20, 7
      %p223 = por %p221, %p222
      %p224 = scmp.ne.s32.totalorder %s216, %s219
      %p225 = scmp.eq.s32.totalorder %s20, 0
      %p226 = por %p224, %p225
      %p227 = scmp.ne.s32.totalorder %s216, %s219
      %p228 = scmp.eq.s32.totalorder %s25, 7
      %p229 = por %p227, %p228
      %p230 = scmp.ne.s32.totalorder %s219, %s220
      %p231 = scmp.eq.s32.totalorder %s25, 0
      %p232 = por %p230, %p231
      %p233 = scmp.ne.s32.totalorder %s219, %s220
      %p234 = scmp.eq.s32.totalorder %s26, 7
      %p235 = por %p233, %p234
      %p237 = scmp.ne.s32.totalorder %s220, %s236
      %p238 = scmp.eq.s32.totalorder %s26, 0
      %p239 = por %p237, %p238
      %p240 = scmp.le.s32.totalorder 1, %s20
      %p241 = scmp.lt.s32.totalorder %s20, 9
      %p242 = pnand %p240, %p241
      %p243 = pneg %p242
      // Predicated region
      $region9: #{tpu_custom_call.1} parent=5 // pred_check
        _
      $region10: #{tpu_custom_call.1} parent=5 // pred_check_branch
        %245 = sbr.rel (%p242) target = $region12
      $region11: #{tpu_custom_call.1} parent=5 // pred_region
        %s246 = ssub.s32 %s20, 1
        // Predicated region
        $region13: #{tpu_custom_call.1} parent=11 // pred_check
          %p247 = pneg %p157
        $region14: #{tpu_custom_call.1} parent=11 // pred_check_branch
          %249 = sbr.rel (%p247) target = $region16
        $region15: #{tpu_custom_call.1} parent=11 // pred_region
          _
        $region16: #{tpu_custom_call.1} parent=11 // pred_fallthru
          _
        // Predicated region
        $region17: #{tpu_custom_call.1} parent=11 // pred_check
          %p250 = pneg %p178
        $region18: #{tpu_custom_call.1} parent=11 // pred_check_branch
          %252 = sbr.rel (%p250) target = $region20
        $region19: #{tpu_custom_call.1} parent=11 // pred_region
          _
        $region20: #{tpu_custom_call.1} parent=11 // pred_fallthru
          _
      $region12: #{tpu_custom_call.1} parent=5 // pred_fallthru
        _
      %p253 = scmp.lt.s32.totalorder %s20, 8
      // Predicated region
      $region21: #{tpu_custom_call.1} parent=5 // pred_check
        %p254 = pneg %p253
      $region22: #{tpu_custom_call.1} parent=5 // pred_check_branch
        %256 = sbr.rel (%p254) target = $region24
      $region23: #{tpu_custom_call.1} parent=5 // pred_region
        // Predicated region
        $region25: #{tpu_custom_call.1} parent=23 // pred_check
          %p257 = pneg %p52
        $region26: #{tpu_custom_call.1} parent=23 // pred_check_branch
          %259 = sbr.rel (%p257) target = $region28
        $region27: #{tpu_custom_call.1} parent=23 // pred_region
          %p260 = scmp.lt.s32.totalorder %s27, 1
          %s261 = scalar_select %p260, %s27, 1
          %s262 = smul.addr %s261, 8
          %s263 = scalar_lea.vmem %s0, %s262
        $region28: #{tpu_custom_call.1} parent=23 // pred_fallthru
          _
        // Predicated region
        $region29: #{tpu_custom_call.1} parent=23 // pred_check
          %p264 = pneg %p78
        $region30: #{tpu_custom_call.1} parent=23 // pred_check_branch
          %266 = sbr.rel (%p264) target = $region32
        $region31: #{tpu_custom_call.1} parent=23 // pred_region
          %p267 = scmp.lt.s32.totalorder %s27, 1
          %s268 = scalar_select %p267, %s27, 1
          %s269 = smul.addr %s268, 4
          %s270 = scalar_lea.vmem %s1, %s269
        $region32: #{tpu_custom_call.1} parent=23 // pred_fallthru
          _
        // Predicated region
        $region33: #{tpu_custom_call.1} parent=23 // pred_check
          %p271 = pneg %p104
        $region34: #{tpu_custom_call.1} parent=23 // pred_check_branch
          %273 = sbr.rel (%p271) target = $region36
        $region35: #{tpu_custom_call.1} parent=23 // pred_region
          %p274 = scmp.lt.s32.totalorder %s28, 3
          %s275 = scalar_select %p274, %s28, 3
          %s276 = smul.addr %s275, 4
          %s277 = smul.addr %s276, 8
          %s278 = scalar_lea.vmem %s2, %s277
        $region36: #{tpu_custom_call.1} parent=23 // pred_fallthru
          _
        // Predicated region
        $region37: #{tpu_custom_call.1} parent=23 // pred_check
          %p279 = pneg %p130
        $region38: #{tpu_custom_call.1} parent=23 // pred_check_branch
          %281 = sbr.rel (%p279) target = $region40
        $region39: #{tpu_custom_call.1} parent=23 // pred_region
          %p282 = scmp.lt.s32.totalorder %s28, 3
          %s283 = scalar_select %p282, %s28, 3
          %s284 = scalar_lea.vmem %s3, %s283
        $region40: #{tpu_custom_call.1} parent=23 // pred_fallthru
          _
      $region24: #{tpu_custom_call.1} parent=5 // pred_fallthru
        _
      %p285 = scmp.le.s32.totalorder 1, %s20
      %p286 = scmp.lt.s32.totalorder %s20, 9
      %p287 = pnand %p285, %p286
      %p288 = pneg %p287
      // Predicated region
      $region41: #{tpu_custom_call.1} parent=5 // pred_check
        _
      $region42: #{tpu_custom_call.1} parent=5 // pred_check_branch
        %290 = sbr.rel (%p287) target = $region44
      $region43: #{tpu_custom_call.1} parent=5 // pred_region
        %s291 = ssub.s32 %s20, 1
        %p292 = scmp.lt.s32.totalorder %s29, 1
        %s293 = scalar_select %p292, %s29, 1
        %s294 = smul.addr %s293, 8
        %s295 = scalar_lea.vmem %s0, %s294
        %p296 = pneg %p58
        %p297 = pneg %p55
        %p298 = scmp.lt.s32.totalorder %s29, 1
        %s299 = scalar_select %p298, %s29, 1
        %s300 = smul.addr %s299, 4
        %s301 = scalar_lea.vmem %s1, %s300
        %p302 = pneg %p84
        %p303 = pneg %p81
        %p304 = scmp.lt.s32.totalorder %s30, 3
        %s305 = scalar_select %p304, %s30, 3
        %s306 = smul.addr %s305, 4
        %s307 = smul.addr %s306, 8
        %s308 = scalar_lea.vmem %s2, %s307
        %p309 = pneg %p110
        %p310 = pneg %p107
        %p311 = scmp.lt.s32.totalorder %s30, 3
        %s312 = scalar_select %p311, %s30, 3
        %s313 = scalar_lea.vmem %s3, %s312
        %p314 = pneg %p136
        %p315 = pneg %p133
        %p316 = pneg %p157
        %p317 = pneg %p154
        %p318 = pneg %p178
        %p319 = pneg %p175
        %p320 = pneg %p204
        %p321 = pneg %p201
        %s322 = sand.u32 %s191, 1
        %s323 = scalar_lea.sflag [#allocation4], %s322
        %s324 = sand.u32 %s191, 1
        %s325 = smul.addr %s324, 8
        %s326 = scalar_lea.vmem [#allocation3], %s325
        %p327 = pneg %p232
        %p328 = pneg %p229
        %s329 = sand.u32 %s219, 1
        %s330 = scalar_lea.sflag [#allocation6], %s329
        %s331 = sand.u32 %s219, 1
        %s332 = smul.addr %s331, 8
        %s333 = scalar_lea.vmem [#allocation5], %s332
        %p334 = scmp.lt.s32.totalorder %s29, 1
        %s335 = scalar_select %p334, %s29, 1
        %s336 = smul.addr %s335, 8
        %s337 = scalar_lea.vmem %s0, %s336
        %p338 = scmp.lt.s32.totalorder %s29, 1
        %s339 = scalar_select %p338, %s29, 1
        %s340 = smul.addr %s339, 4
        %s341 = scalar_lea.vmem %s1, %s340
        %p342 = scmp.lt.s32.totalorder %s30, 3
        %s343 = scalar_select %p342, %s30, 3
        %s344 = smul.addr %s343, 4
        %s345 = smul.addr %s344, 8
        %s346 = scalar_lea.vmem %s2, %s345
        %p347 = scmp.lt.s32.totalorder %s30, 3
        %s348 = scalar_select %p347, %s30, 3
        %s349 = scalar_lea.vmem %s3, %s348
        %v350 = vld [vmem:[%s337] sm:$0xff]
        %v351 = vld [vmem:[%s346] sm:$0xff]
        %v352 = vld [vmem:[%s346 + $0x8] sm:$0xff]
        %v353 = vld [vmem:[%s346 + $0x10] sm:$0xff]
        %v354 = vld [vmem:[%s346 + $0x18] sm:$0xff]
        %v355 = vld [vmem:[%s349] sm:$0x1]
        %v357 = vlaneseq
        %v358 = vshrl.u32 %v357, 7
        %v359 = vsub.s32 0, %v358
        %v360 = vrot.slane %v355, %v359
        %vm362 = vcmask 261120
        %v364 = vsel %vm362, %v350, 0
        %366 = vmatprep.subr.mxu0 0.0
        %367 = vmatpush1.msra.mxu0 %v351
        %368 = vmatprep.subr.mxu0 0.0
        %369 = vmatpush1.msra.mxu0 %v352
        %370 = vmatprep.subr.mxu0 0.0
        %371 = vmatpush1.msra.mxu0 %v353
        %372 = vmatprep.subr.mxu0 0.0
        %373 = vmatpush1.msra.mxu0 %v354
        %374 = vmatprep.subr.mxu0 0.0
        %375 = vmatpush1.msra.mxu0 0.0
        %376 = vmatprep.subr.mxu0 0.0
        %377 = vmatpush1.msra.mxu0 0.0
        %378 = vmatprep.subr.mxu0 0.0
        %379 = vmatpush1.msra.mxu0 0.0
        %380 = vmatprep.subr.mxu0 0.0
        %381 = vmatpush1.msra.mxu0 0.0
        %382 = vmatprep.subr.mxu0 0.0
        %383 = vmatpush1.msra.mxu0 0.0
        %384 = vmatprep.subr.mxu0 0.0
        %385 = vmatpush1.msra.mxu0 0.0
        %386 = vmatprep.subr.mxu0 0.0
        %387 = vmatpush1.msra.mxu0 0.0
        %388 = vmatprep.subr.mxu0 0.0
        %389 = vmatpush1.msra.mxu0 0.0
        %390 = vmatprep.subr.mxu0 0.0
        %391 = vmatpush1.msra.mxu0 0.0
        %392 = vmatprep.subr.mxu0 0.0
        %393 = vmatpush1.msra.mxu0 0.0
        %394 = vmatprep.subr.mxu0 0.0
        %395 = vmatpush1.msra.mxu0 0.0
        %396 = vmatprep.subr.mxu0 0.0
        %397 = vmatpush1.msra.mxu0 0.0
        %398 = vmatprep.subr.mxu0 0.0
        %399 = vmatpush1.msra.mxu0 0.0
        %400 = vmatprep.subr.mxu0 0.0
        %401 = vmatpush1.msra.mxu0 0.0
        %402 = vmatprep.subr.mxu0 0.0
        %403 = vmatpush1.msra.mxu0 0.0
        %404 = vmatprep.subr.mxu0 0.0
        %405 = vmatpush1.msra.mxu0 0.0
        %406 = vmatprep.subr.mxu0 0.0
        %407 = vmatpush1.msra.mxu0 0.0
        %408 = vmatprep.subr.mxu0 0.0
        %409 = vmatpush1.msra.mxu0 0.0
        %410 = vmatprep.subr.mxu0 0.0
        %411 = vmatpush1.msra.mxu0 0.0
        %412 = vmatprep.subr.mxu0 0.0
        %413 = vmatpush1.msra.mxu0 0.0
        %414 = vmatprep.subr.mxu0 0.0
        %415 = vmatpush1.msra.mxu0 0.0
        %416 = vmatprep.subr.mxu0 0.0
        %417 = vmatpush1.msra.mxu0 0.0
        %418 = vmatprep.subr.mxu0 0.0
        %419 = vmatpush1.msra.mxu0 0.0
        %420 = vmatprep.subr.mxu0 0.0
        %421 = vmatpush1.msra.mxu0 0.0
        %422 = vmatprep.subr.mxu0 0.0
        %423 = vmatpush1.msra.mxu0 0.0
        %424 = vmatprep.subr.mxu0 0.0
        %425 = vmatpush1.msra.mxu0 0.0
        %426 = vmatprep.subr.mxu0 0.0
        %427 = vmatpush1.msra.mxu0 0.0
        %428 = vmatprep.subr.mxu0 0.0
        %429 = vmatpush1.msra.mxu0 0.0
        %430 = vmatprep.mubr.f32.mxu0 0.0
        %431 = vmatmul.mubr.f32.gmra.mrb[0].mxu0 %v364
        %v432 = vpop.f32.mrb[0].mxu0
        %v433 = vadd.f32 %v360, %v432
        %v434 = vpop.f32.mrb[0].mxu0
        %435 = vdwg.mxu0
        %v436 = vld [vmem:[%s341] sm:$0xf]
        %v437 = vunpack.c.l.bf16 %v436
        %439 = vrot.lane.b32.xlu0 %v433, 120
        %v440 = vpop.permute.xlu0 %439
        %vm441 = vcmask 64512
        %v442 = vsel %vm441, %v433, 0
        %v444 = vsel %vm441, %v440, 0
        %446 = vmatprep.subr.mxu0 0.0
        %447 = vmatpush1.xpose.msra.mxu0 %v444
        %448 = vmatprep.subr.mxu0 0.0
        %449 = vmatpush1.xpose.msra.mxu0 0.0
        %450 = vmatprep.subr.mxu0 0.0
        %451 = vmatpush1.xpose.msra.mxu0 0.0
        %452 = vmatprep.subr.mxu0 0.0
        %453 = vmatpush1.xpose.msra.mxu0 0.0
        %454 = vmatprep.subr.mxu0 0.0
        %455 = vmatpush1.xpose.msra.mxu0 0.0
        %456 = vmatprep.subr.mxu0 0.0
        %457 = vmatpush1.xpose.msra.mxu0 0.0
        %458 = vmatprep.subr.mxu0 0.0
        %459 = vmatpush1.xpose.msra.mxu0 0.0
        %460 = vmatprep.subr.mxu0 0.0
        %461 = vmatpush1.xpose.msra.mxu0 0.0
        %462 = vmatprep.subr.mxu0 0.0
        %463 = vmatpush1.xpose.msra.mxu0 0.0
        %464 = vmatprep.subr.mxu0 0.0
        %465 = vmatpush1.xpose.msra.mxu0 0.0
        %466 = vmatprep.subr.mxu0 0.0
        %467 = vmatpush1.xpose.msra.mxu0 0.0
        %468 = vmatprep.subr.mxu0 0.0
        %469 = vmatpush1.xpose.msra.mxu0 0.0
        %470 = vmatprep.subr.mxu0 0.0
        %471 = vmatpush1.xpose.msra.mxu0 0.0
        %472 = vmatprep.subr.mxu0 0.0
        %473 = vmatpush1.xpose.msra.mxu0 0.0
        %474 = vmatprep.subr.mxu0 0.0
        %475 = vmatpush1.xpose.msra.mxu0 0.0
        %476 = vmatprep.subr.mxu0 0.0
        %477 = vmatpush1.xpose.msra.mxu0 0.0
        %478 = vmatprep.subr.mxu0 0.0
        %479 = vmatpush1.xpose.msra.mxu0 0.0
        %480 = vmatprep.subr.mxu0 0.0
        %481 = vmatpush1.xpose.msra.mxu0 0.0
        %482 = vmatprep.subr.mxu0 0.0
        %483 = vmatpush1.xpose.msra.mxu0 0.0
        %484 = vmatprep.subr.mxu0 0.0
        %485 = vmatpush1.xpose.msra.mxu0 0.0
        %486 = vmatprep.subr.mxu0 0.0
        %487 = vmatpush1.xpose.msra.mxu0 0.0
        %488 = vmatprep.subr.mxu0 0.0
        %489 = vmatpush1.xpose.msra.mxu0 0.0
        %490 = vmatprep.subr.mxu0 0.0
        %491 = vmatpush1.xpose.msra.mxu0 0.0
        %492 = vmatprep.subr.mxu0 0.0
        %493 = vmatpush1.xpose.msra.mxu0 0.0
        %494 = vmatprep.subr.mxu0 0.0
        %495 = vmatpush1.xpose.msra.mxu0 0.0
        %496 = vmatprep.subr.mxu0 0.0
        %497 = vmatpush1.xpose.msra.mxu0 0.0
        %498 = vmatprep.subr.mxu0 0.0
        %499 = vmatpush1.xpose.msra.mxu0 0.0
        %500 = vmatprep.subr.mxu0 0.0
        %501 = vmatpush1.xpose.msra.mxu0 0.0
        %502 = vmatprep.subr.mxu0 0.0
        %503 = vmatpush1.xpose.msra.mxu0 0.0
        %504 = vmatprep.subr.mxu0 0.0
        %505 = vmatpush1.xpose.msra.mxu0 0.0
        %506 = vmatprep.subr.mxu0 0.0
        %507 = vmatpush1.xpose.msra.mxu0 0.0
        %508 = vmatprep.subr.mxu0 0.0
        %509 = vmatpush1.xpose.msra.mxu0 0.0
        %510 = vmatprep.mubr.f32.mxu0 0.0
        %511 = vmatmul.mubr.f32.gmra.mrb[0].mxu0 %v442
        %v512 = vpop.f32.mrb[0].mxu0
        %v513 = vadd.f32 %v437, %v512
        %v514 = vpop.f32.mrb[0].mxu0
        %515 = vdwg.mxu0
        %v516 = vsel %vm441, %v513, -inf
        %517 = vmax.xlane.f32.xlu0 %v516
        %v518 = vpop.xlane.xlu0 %517
        %v519 = vsub.f32 %v513, %v518
        %v520 = vmul.f32 %v519, 1.442695
        %v521 = vpow.pop %v520
        %v522 = vsel %vm441, %v521, 0.0
        %523 = vadd.xlane.f32.xlu0 %v522
        %v524 = vpop.xlane.xlu0 %523
        %v525 = vrcp.pop %v524
        %v526 = vmul.f32 %v521, %v525
        %527 = vst.msk [vmem:[%s333] sm:$0xff] %vm441, %v526
        %528 = vrot.lane.b32.xlu0 %v433, 112
        %v529 = vpop.permute.xlu0 %528
        %v532 = vsel %vm441, %v526, 0
        %534 = vmatprep.subr.mxu0 0.0
        %535 = vmatpush1.msra.mxu0 %v529
        %536 = vmatprep.subr.mxu0 0.0
        %537 = vmatpush1.msra.mxu0 0.0
        %538 = vmatprep.subr.mxu0 0.0
        %539 = vmatpush1.msra.mxu0 0.0
        %540 = vmatprep.subr.mxu0 0.0
        %541 = vmatpush1.msra.mxu0 0.0
        %542 = vmatprep.subr.mxu0 0.0
        %543 = vmatpush1.msra.mxu0 0.0
        %544 = vmatprep.subr.mxu0 0.0
        %545 = vmatpush1.msra.mxu0 0.0
        %546 = vmatprep.subr.mxu0 0.0
        %547 = vmatpush1.msra.mxu0 0.0
        %548 = vmatprep.subr.mxu0 0.0
        %549 = vmatpush1.msra.mxu0 0.0
        %550 = vmatprep.subr.mxu0 0.0
        %551 = vmatpush1.msra.mxu0 0.0
        %552 = vmatprep.subr.mxu0 0.0
        %553 = vmatpush1.msra.mxu0 0.0
        %554 = vmatprep.subr.mxu0 0.0
        %555 = vmatpush1.msra.mxu0 0.0
        %556 = vmatprep.subr.mxu0 0.0
        %557 = vmatpush1.msra.mxu0 0.0
        %558 = vmatprep.subr.mxu0 0.0
        %559 = vmatpush1.msra.mxu0 0.0
        %560 = vmatprep.subr.mxu0 0.0
        %561 = vmatpush1.msra.mxu0 0.0
        %562 = vmatprep.subr.mxu0 0.0
        %563 = vmatpush1.msra.mxu0 0.0
        %564 = vmatprep.subr.mxu0 0.0
        %565 = vmatpush1.msra.mxu0 0.0
        %566 = vmatprep.subr.mxu0 0.0
        %567 = vmatpush1.msra.mxu0 0.0
        %568 = vmatprep.subr.mxu0 0.0
        %569 = vmatpush1.msra.mxu0 0.0
        %570 = vmatprep.subr.mxu0 0.0
        %571 = vmatpush1.msra.mxu0 0.0
        %572 = vmatprep.subr.mxu0 0.0
        %573 = vmatpush1.msra.mxu0 0.0
        %574 = vmatprep.subr.mxu0 0.0
        %575 = vmatpush1.msra.mxu0 0.0
        %576 = vmatprep.subr.mxu0 0.0
        %577 = vmatpush1.msra.mxu0 0.0
        %578 = vmatprep.subr.mxu0 0.0
        %579 = vmatpush1.msra.mxu0 0.0
        %580 = vmatprep.subr.mxu0 0.0
        %581 = vmatpush1.msra.mxu0 0.0
        %582 = vmatprep.subr.mxu0 0.0
        %583 = vmatpush1.msra.mxu0 0.0
        %584 = vmatprep.subr.mxu0 0.0
        %585 = vmatpush1.msra.mxu0 0.0
        %586 = vmatprep.subr.mxu0 0.0
        %587 = vmatpush1.msra.mxu0 0.0
        %588 = vmatprep.subr.mxu0 0.0
        %589 = vmatpush1.msra.mxu0 0.0
        %590 = vmatprep.subr.mxu0 0.0
        %591 = vmatpush1.msra.mxu0 0.0
        %592 = vmatprep.subr.mxu0 0.0
        %593 = vmatpush1.msra.mxu0 0.0
        %594 = vmatprep.subr.mxu0 0.0
        %595 = vmatpush1.msra.mxu0 0.0
        %596 = vmatprep.subr.mxu0 0.0
        %597 = vmatpush1.msra.mxu0 0.0
        %598 = vmatprep.mubr.f32.mxu0 0.0
        %599 = vmatmul.mubr.f32.gmra.mrb[0].mxu0 %v532
        %v600 = vpop.f32.mrb[0].mxu0
        %v601 = vadd.f32 0.0, %v600
        %v602 = vpop.f32.mrb[0].mxu0
        %603 = vdwg.mxu0
        %p604 = scmp.eq.s32.totalorder %s30, 0
        // Predicated region
        $region45: #{tpu_custom_call.1} parent=43 // pred_check
          %p605 = pneg %p604
        $region46: #{tpu_custom_call.1} parent=43 // pred_check_branch
          %607 = sbr.rel (%p605) target = $region48
        $region47: #{tpu_custom_call.1} parent=43 // pred_region
          %608 = vst.msk [vmem:[#allocation2] sm:$0xff] %vm441, %v601
        $region48: #{tpu_custom_call.1} parent=43 // pred_fallthru
          _
        %p609 = scmp.eq.s32.totalorder %s30, 1
        // Predicated region
        $region49: #{tpu_custom_call.1} parent=43 // pred_check
          %p610 = pneg %p609
        $region50: #{tpu_custom_call.1} parent=43 // pred_check_branch
          %612 = sbr.rel (%p610) target = $region52
        $region51: #{tpu_custom_call.1} parent=43 // pred_region
          %614 = vrot.lane.b32.xlu0 %v601, 8
          %v615 = vpop.permute.xlu0 %614
          %vm617 = vcmask 130112
          %618 = vst.msk [vmem:[#allocation2] sm:$0xff] %vm617, %v615
        $region52: #{tpu_custom_call.1} parent=43 // pred_fallthru
          _
        %p619 = scmp.eq.s32.totalorder %s30, 2
        // Predicated region
        $region53: #{tpu_custom_call.1} parent=43 // pred_check
          %p620 = pneg %p619
        $region54: #{tpu_custom_call.1} parent=43 // pred_check_branch
          %622 = sbr.rel (%p620) target = $region56
        $region55: #{tpu_custom_call.1} parent=43 // pred_region
          %624 = vrot.lane.b32.xlu0 %v601, 16
          %v625 = vpop.permute.xlu0 %624
          %vm627 = vcmask 195712
          %628 = vst.msk [vmem:[#allocation2] sm:$0xff] %vm627, %v625
        $region56: #{tpu_custom_call.1} parent=43 // pred_fallthru
          _
        %p629 = scmp.eq.s32.totalorder %s30, 3
        // Predicated region
        $region57: #{tpu_custom_call.1} parent=43 // pred_check
          %p630 = pneg %p629
        $region58: #{tpu_custom_call.1} parent=43 // pred_check_branch
          %632 = sbr.rel (%p630) target = $region60
        $region59: #{tpu_custom_call.1} parent=43 // pred_region
          %634 = vrot.lane.b32.xlu0 %v601, 24
          %v635 = vpop.permute.xlu0 %634
          %vm637 = vcmask 261312
          %638 = vst.msk [vmem:[#allocation2] sm:$0xff] %vm637, %v635
          %v639 = vld [vmem:[#allocation2] sm:$0xff]
          %v640 = vld [vmem:[%s4] sm:$0xff]
          %v641 = vld [vmem:[%s4 + $0x8] sm:$0xff]
          %v642 = vld [vmem:[%s4 + $0x10] sm:$0xff]
          %v643 = vld [vmem:[%s4 + $0x18] sm:$0xff]
          %v644 = vld [vmem:[%s5] sm:$0x1]
          %v646 = vlaneseq
          %v647 = vshrl.u32 %v646, 7
          %v648 = vsub.s32 0, %v647
          %v649 = vrot.slane %v644, %v648
          %v652 = vsel %vm362, %v639, 0
          %654 = vmatprep.subr.mxu0 0.0
          %655 = vmatpush1.msra.mxu0 %v640
          %656 = vmatprep.subr.mxu0 0.0
          %657 = vmatpush1.msra.mxu0 %v641
          %658 = vmatprep.subr.mxu0 0.0
          %659 = vmatpush1.msra.mxu0 %v642
          %660 = vmatprep.subr.mxu0 0.0
          %661 = vmatpush1.msra.mxu0 %v643
          %662 = vmatprep.subr.mxu0 0.0
          %663 = vmatpush1.msra.mxu0 0.0
          %664 = vmatprep.subr.mxu0 0.0
          %665 = vmatpush1.msra.mxu0 0.0
          %666 = vmatprep.subr.mxu0 0.0
          %667 = vmatpush1.msra.mxu0 0.0
          %668 = vmatprep.subr.mxu0 0.0
          %669 = vmatpush1.msra.mxu0 0.0
          %670 = vmatprep.subr.mxu0 0.0
          %671 = vmatpush1.msra.mxu0 0.0
          %672 = vmatprep.subr.mxu0 0.0
          %673 = vmatpush1.msra.mxu0 0.0
          %674 = vmatprep.subr.mxu0 0.0
          %675 = vmatpush1.msra.mxu0 0.0
          %676 = vmatprep.subr.mxu0 0.0
          %677 = vmatpush1.msra.mxu0 0.0
          %678 = vmatprep.subr.mxu0 0.0
          %679 = vmatpush1.msra.mxu0 0.0
          %680 = vmatprep.subr.mxu0 0.0
          %681 = vmatpush1.msra.mxu0 0.0
          %682 = vmatprep.subr.mxu0 0.0
          %683 = vmatpush1.msra.mxu0 0.0
          %684 = vmatprep.subr.mxu0 0.0
          %685 = vmatpush1.msra.mxu0 0.0
          %686 = vmatprep.subr.mxu0 0.0
          %687 = vmatpush1.msra.mxu0 0.0
          %688 = vmatprep.subr.mxu0 0.0
          %689 = vmatpush1.msra.mxu0 0.0
          %690 = vmatprep.subr.mxu0 0.0
          %691 = vmatpush1.msra.mxu0 0.0
          %692 = vmatprep.subr.mxu0 0.0
          %693 = vmatpush1.msra.mxu0 0.0
          %694 = vmatprep.subr.mxu0 0.0
          %695 = vmatpush1.msra.mxu0 0.0
          %696 = vmatprep.subr.mxu0 0.0
          %697 = vmatpush1.msra.mxu0 0.0
          %698 = vmatprep.subr.mxu0 0.0
          %699 = vmatpush1.msra.mxu0 0.0
          %700 = vmatprep.subr.mxu0 0.0
          %701 = vmatpush1.msra.mxu0 0.0
          %702 = vmatprep.subr.mxu0 0.0
          %703 = vmatpush1.msra.mxu0 0.0
          %704 = vmatprep.subr.mxu0 0.0
          %705 = vmatpush1.msra.mxu0 0.0
          %706 = vmatprep.subr.mxu0 0.0
          %707 = vmatpush1.msra.mxu0 0.0
          %708 = vmatprep.subr.mxu0 0.0
          %709 = vmatpush1.msra.mxu0 0.0
          %710 = vmatprep.subr.mxu0 0.0
          %711 = vmatpush1.msra.mxu0 0.0
          %712 = vmatprep.subr.mxu0 0.0
          %713 = vmatpush1.msra.mxu0 0.0
          %714 = vmatprep.subr.mxu0 0.0
          %715 = vmatpush1.msra.mxu0 0.0
          %716 = vmatprep.subr.mxu0 0.0
          %717 = vmatpush1.msra.mxu0 0.0
          %718 = vmatprep.mubr.f32.mxu0 0.0
          %719 = vmatmul.mubr.f32.gmra.mrb[0].mxu0 %v652
          %v720 = vpop.f32.mrb[0].mxu0
          %v721 = vadd.f32 %v649, %v720
          %v722 = vpop.f32.mrb[0].mxu0
          %723 = vdwg.mxu0
          %724 = vst.msk [vmem:[%s326] sm:$0xff] %vm362, %v721
        $region60: #{tpu_custom_call.1} parent=43 // pred_fallthru
          _
        %s725 = sand.u32 %s191, 1
        %s726 = scalar_lea.sflag [#allocation4], %s725
        %s727 = sand.u32 %s191, 1
        %s728 = smul.addr %s727, 8
        %s729 = scalar_lea.vmem [#allocation3], %s728
        %s730 = sand.u32 %s219, 1
        %s731 = scalar_lea.sflag [#allocation6], %s730
        %s732 = sand.u32 %s219, 1
        %s733 = smul.addr %s732, 8
        %s734 = scalar_lea.vmem [#allocation5], %s733
        // Predicated region
        $region61: #{tpu_custom_call.1} parent=43 // pred_check
          %p735 = pneg %p201
        $region62: #{tpu_custom_call.1} parent=43 // pred_check_branch
          %737 = sbr.rel (%p735) target = $region64
        $region63: #{tpu_custom_call.1} parent=43 // pred_region
          %s739 = ssub.s32 128, 128
          %740 = vsyncadd %s726, %s739
          %s741 = smul.addr %s29, 128
          %s742 = scalar_lea.hbm %s6, %s741
          %s744 = sshll.u32 %s729, 4
          %s745 = int_to_ptr.vmem [resolvable:$true] %s744
          %747 = dma.vmem_to_hbm [thread:$0]  %s745, 128, %s742, %s726
        $region64: #{tpu_custom_call.1} parent=43 // pred_fallthru
          _
        // Predicated region
        $region65: #{tpu_custom_call.1} parent=43 // pred_check
          %p748 = pneg %p229
        $region66: #{tpu_custom_call.1} parent=43 // pred_check_branch
          %750 = sbr.rel (%p748) target = $region68
        $region67: #{tpu_custom_call.1} parent=43 // pred_region
          %s752 = ssub.s32 128, 128
          %753 = vsyncadd %s731, %s752
          %s754 = smul.addr %s29, 4
          %s755 = sadd.s32 %s30, %s754
          %s756 = smul.addr %s755, 128
          %s757 = scalar_lea.hbm %s7, %s756
          %s759 = sshll.u32 %s734, 4
          %s760 = int_to_ptr.vmem [resolvable:$true] %s759
          %762 = dma.vmem_to_hbm [thread:$0]  %s760, 128, %s757, %s731
        $region68: #{tpu_custom_call.1} parent=43 // pred_fallthru
          _
      $region44: #{tpu_custom_call.1} parent=5 // pred_fallthru
        _
      %p763 = scmp.le.s32.totalorder 2, %s20
      // Predicated region
      $region69: #{tpu_custom_call.1} parent=5 // pred_check
        %p764 = pneg %p763
      $region70: #{tpu_custom_call.1} parent=5 // pred_check_branch
        %766 = sbr.rel (%p764) target = $region72
      $region71: #{tpu_custom_call.1} parent=5 // pred_region
        %s767 = ssub.s32 %s20, 2
        // Predicated region
        $region73: #{tpu_custom_call.1} parent=71 // pred_check
          %p768 = pneg %p207
        $region74: #{tpu_custom_call.1} parent=71 // pred_check_branch
          %770 = sbr.rel (%p768) target = $region76
        $region75: #{tpu_custom_call.1} parent=71 // pred_region
          %s771 = sand.u32 %s192, 1
          %s772 = scalar_lea.sflag [#allocation4], %s771
          %s773 = sand.u32 %s192, 1
          %s774 = smul.addr %s773, 8
          %s775 = scalar_lea.vmem [#allocation3], %s774
          %776 = dma.done %s772, 128
        $region76: #{tpu_custom_call.1} parent=71 // pred_fallthru
          _
        // Predicated region
        $region77: #{tpu_custom_call.1} parent=71 // pred_check
          %p777 = pneg %p235
        $region78: #{tpu_custom_call.1} parent=71 // pred_check_branch
          %779 = sbr.rel (%p777) target = $region80
        $region79: #{tpu_custom_call.1} parent=71 // pred_region
          %s780 = sand.u32 %s220, 1
          %s781 = scalar_lea.sflag [#allocation6], %s780
          %s782 = sand.u32 %s220, 1
          %s783 = smul.addr %s782, 8
          %s784 = scalar_lea.vmem [#allocation5], %s783
          %785 = dma.done %s781, 128
        $region80: #{tpu_custom_call.1} parent=71 // pred_fallthru
          _
      $region72: #{tpu_custom_call.1} parent=5 // pred_fallthru
        _
    $region6: #{tpu_custom_call.1} parent=1 // loop_footer
      %s24 = sadd.s32 1, %s20
    $region7: #{tpu_custom_call.1} parent=1 // loop_footer_branch
      %19 = sbr.rel target = $region3
    $region8: #{tpu_custom_call.1} parent=1 // loop_exit
      _
    %786 = vsyncpa [#allocation4], 1
    %s787 = scalar_lea.sflag [#allocation4], 1
    %788 = vsyncpa %s787, 1
    %789 = vsyncpa [#allocation6], 1
    %s790 = scalar_lea.sflag [#allocation6], 1
    %791 = vsyncpa %s790, 1

</llo_original>
